<compile_context>
chip_gen: v7x
topology: tpu7x:2x2x1
jax: 0.10.0
libtpu: 0.0.40
codegen_flags: <defaults>
</compile_context>

<pallas_src>
import math

import jax
import jax.numpy as jnp
from jax.experimental import pallas as pl
from jax.experimental.pallas import tpu as pltpu

NEG_SLOPE = 0.2          # nn.LeakyReLU(0.2) in the original module
LANE = 128               # TPU lane width
TM_DEFAULT = 512         # batch tile (amortizes ~0.35 us/grid-step overhead)


def _round_up(x, m):
    return ((x + m - 1) // m) * m


def _leaky_relu(h):
    return jnp.where(h > 0, h, NEG_SLOPE * h)


# ---------------------------------------------------------------------------
# Fused 4-layer MLP kernel. Matmuls on the MXU (bf16 operands, f32 accum),
# LeakyReLU on the VPU (bf16), tanh on the EUP. One grid axis over the batch.
# ---------------------------------------------------------------------------
def generator_kernel(x_ref,
                     w1_ref, b1_ref,
                     w2_ref, b2_ref,
                     w3_ref, b3_ref,
                     w4_ref, b4_ref,
                     o_ref):
    x = x_ref[...]                                   # already bf16

    h = jnp.dot(x, w1_ref[...], preferred_element_type=jnp.float32) + b1_ref[...]
    h = _leaky_relu(h.astype(jnp.bfloat16))          # bf16 VPU epilogue

    h = jnp.dot(h, w2_ref[...], preferred_element_type=jnp.float32) + b2_ref[...]
    h = _leaky_relu(h.astype(jnp.bfloat16))

    h = jnp.dot(h, w3_ref[...], preferred_element_type=jnp.float32) + b3_ref[...]
    h = _leaky_relu(h.astype(jnp.bfloat16))

    h = jnp.dot(h, w4_ref[...], preferred_element_type=jnp.float32) + b4_ref[...]
    o_ref[...] = jnp.tanh(h)                         # f32 output (pad cols -> 0)


# ---------------------------------------------------------------------------
# Parameter handling.
# init_generator_params: f32 reference params, nn.Linear default init,
# weights stored pre-transposed as (in_features, out_features).
# prepare_generator_params: one-time conversion to the kernel layout
# (bf16 weights, output dim padded to a multiple of 128).
# ---------------------------------------------------------------------------
def init_generator_params(key, latent_dim, state_dim):
    dims = [latent_dim + 4, 128, 256, 512, state_dim]
    params = {}
    for i in range(4):
        fan_in, fan_out = dims[i], dims[i + 1]
        key, kw, kb = jax.random.split(key, 3)
        bound = 1.0 / math.sqrt(fan_in)
        params[f"w{i+1}"] = jax.random.uniform(
            kw, (fan_in, fan_out), jnp.float32, minval=-bound, maxval=bound)
        params[f"b{i+1}"] = jax.random.uniform(
            kb, (1, fan_out), jnp.float32, minval=-bound, maxval=bound)
    return params


def prepare_generator_params(params):
    state_dim = params["w4"].shape[1]
    out_pad = _round_up(state_dim, LANE)
    pad_cols = out_pad - state_dim
    prep = {
        "w1": params["w1"].astype(jnp.bfloat16),
        "b1": params["b1"].astype(jnp.float32),
        "w2": params["w2"].astype(jnp.bfloat16),
        "b2": params["b2"].astype(jnp.float32),
        "w3": params["w3"].astype(jnp.bfloat16),
        "b3": params["b3"].astype(jnp.float32),
        "w4": jnp.pad(params["w4"], ((0, 0), (0, pad_cols))).astype(jnp.bfloat16),
        "b4": jnp.pad(params["b4"], ((0, 0), (0, pad_cols))).astype(jnp.float32),
    }
    return prep, state_dim, out_pad


# ---------------------------------------------------------------------------
# Forward wrapper: 1-D cdiv grid over the batch (no input padding), weights
# VMEM-resident across grid steps, lane-dense padded output store.
# ---------------------------------------------------------------------------
def generator_forward(z, action, prep, state_dim, out_pad, *, tm=TM_DEFAULT):
    batch = z.shape[0]
    # torch.cat([z, action], dim=1) folded here: one narrow bf16 input stream.
    x = jnp.concatenate([z, action], axis=1).astype(jnp.bfloat16)
    in_dim = x.shape[1]

    if batch <= 16:
        tm_eff = batch                 # single tile; block == full batch extent
    else:
        # >= 2 grid steps so the "parallel" batch axis spans both v7x TCs;
        # tile stays a multiple of 8 sublanes and is capped by tm (<= 512/1024).
        tm_eff = min(tm, _round_up(pl.cdiv(batch, 2), 8))
    n_tiles = pl.cdiv(batch, tm_eff)   # last block may be partial (no jnp.pad)

    def resident(arr):
        # same block index every grid step -> stays in VMEM, no re-DMA
        return pl.BlockSpec(arr.shape, lambda i: (0, 0))

    weight_args = (prep["w1"], prep["b1"], prep["w2"], prep["b2"],
                   prep["w3"], prep["b3"], prep["w4"], prep["b4"])
    w_bytes = sum(int(a.size) * a.dtype.itemsize for a in weight_args)

    cost = pl.CostEstimate(
        flops=2 * batch * (in_dim * 128 + 128 * 256 + 256 * 512 + 512 * out_pad),
        transcendentals=batch * out_pad,
        bytes_accessed=int(x.size) * 2 + batch * out_pad * 4 + w_bytes,
    )

    out = pl.pallas_call(
        generator_kernel,
        out_shape=jax.ShapeDtypeStruct((batch, out_pad), jnp.float32),
        grid=(n_tiles,),
        in_specs=[pl.BlockSpec((tm_eff, in_dim), lambda i: (i, 0))]
                 + [resident(a) for a in weight_args],
        out_specs=pl.BlockSpec((tm_eff, out_pad), lambda i: (i, 0)),
        compiler_params=pltpu.CompilerParams(
            dimension_semantics=("parallel",)),
        cost_estimate=cost,
    )(x, *weight_args)

    # pad columns are exact zeros of tanh(0 + 0); drop them only if present
    return out if out_pad == state_dim else out[:, :state_dim]


# ---------------------------------------------------------------------------
# References for correctness checking.
# ---------------------------------------------------------------------------
def generator_ref_bf16(z, action, params):
    """Mirrors the kernel's bf16 operand / f32 accumulation numerics."""
    def dot(a, w):
        return jnp.dot(a, w.astype(jnp.bfloat16),
                       preferred_element_type=jnp.float32)
    x = jnp.concatenate([z, action], axis=1).astype(jnp.bfloat16)
    h = _leaky_relu((dot(x, params["w1"]) + params["b1"]).astype(jnp.bfloat16))
    h = _leaky_relu((dot(h, params["w2"]) + params["b2"]).astype(jnp.bfloat16))
    h = _leaky_relu((dot(h, params["w3"]) + params["b3"]).astype(jnp.bfloat16))
    return jnp.tanh(dot(h, params["w4"]) + params["b4"])


def generator_ref_f32(z, action, params):
    """Full-precision semantic reference (matches the PyTorch module)."""
    x = jnp.concatenate([z, action], axis=1).astype(jnp.float32)
    h = _leaky_relu(x @ params["w1"] + params["b1"])
    h = _leaky_relu(h @ params["w2"] + params["b2"])
    h = _leaky_relu(h @ params["w3"] + params["b3"])
    return jnp.tanh(h @ params["w4"] + params["b4"])


if __name__ == "__main__":
    latent_dim = 28          # latent_dim + 4 = 32 input features
    state_dim = 64

    key = jax.random.PRNGKey(0)
    key, kp = jax.random.split(key)
    params = init_generator_params(kp, latent_dim, state_dim)
    prep, sdim, out_pad = prepare_generator_params(params)

    # --- small single-tile case ------------------------------------------
    batch = 8
    key, kz, ka = jax.random.split(key, 3)
    z = jax.random.normal(kz, (batch, latent_dim), jnp.float32)
    action = jax.random.normal(ka, (batch, 4), jnp.float32)

    out = jax.block_until_ready(generator_forward(z, action, prep, sdim, out_pad))
    assert out.shape == (batch, state_dim)

    ref_bf16 = generator_ref_bf16(z, action, params)
    assert jnp.allclose(out, ref_bf16, atol=1.5e-2, rtol=1.5e-2), \
        float(jnp.max(jnp.abs(out - ref_bf16)))
    ref_f32 = generator_ref_f32(z, action, params)
    assert float(jnp.max(jnp.abs(out - ref_f32))) < 0.1

    # --- multi-tile case with a partial last block (cdiv grid, no padding) --
    batch2 = 40
    key, kz2, ka2 = jax.random.split(key, 3)
    z2 = jax.random.normal(kz2, (batch2, latent_dim), jnp.float32)
    a2 = jax.random.normal(ka2, (batch2, 4), jnp.float32)

    out2 = jax.block_until_ready(
        generator_forward(z2, a2, prep, sdim, out_pad, tm=16))
    assert out2.shape == (batch2, state_dim)
    ref2 = generator_ref_bf16(z2, a2, params)
    assert jnp.allclose(out2, ref2, atol=1.5e-2, rtol=1.5e-2), \
        float(jnp.max(jnp.abs(out2 - ref2)))

    print("KERNEL_OK")
</pallas_src>

<mosaic_0001>
module attributes {stable_mosaic.version = 11 : i64} {
  func.func @generator_kernel(%arg0: i32, %arg1: memref<8x32xbf16, #tpu.memory_space<vmem>>, %arg2: memref<32x128xbf16, #tpu.memory_space<vmem>>, %arg3: memref<1x128xf32, #tpu.memory_space<vmem>>, %arg4: memref<128x256xbf16, #tpu.memory_space<vmem>>, %arg5: memref<1x256xf32, #tpu.memory_space<vmem>>, %arg6: memref<256x512xbf16, #tpu.memory_space<vmem>>, %arg7: memref<1x512xf32, #tpu.memory_space<vmem>>, %arg8: memref<512x128xbf16, #tpu.memory_space<vmem>>, %arg9: memref<1x128xf32, #tpu.memory_space<vmem>>, %arg10: memref<8x128xf32, #tpu.memory_space<vmem>>) attributes {dimension_semantics = [#tpu.dimension_semantics<parallel>], iteration_bounds = array<i64: 1>, scalar_prefetch = 0 : i64, scratch_operands = 0 : i64, tpu.core_type = #tpu.core_type<tc>, window_params = [{transform_indices = @transform_0, window_bounds = array<i64: 8, 32>}, {pipeline_mode = #tpu.pipeline_mode<synchronous>, transform_indices = @transform_1, window_bounds = array<i64: 32, 128>}, {pipeline_mode = #tpu.pipeline_mode<synchronous>, transform_indices = @transform_2, window_bounds = array<i64: 1, 128>}, {pipeline_mode = #tpu.pipeline_mode<synchronous>, transform_indices = @transform_3, window_bounds = array<i64: 128, 256>}, {pipeline_mode = #tpu.pipeline_mode<synchronous>, transform_indices = @transform_4, window_bounds = array<i64: 1, 256>}, {pipeline_mode = #tpu.pipeline_mode<synchronous>, transform_indices = @transform_5, window_bounds = array<i64: 256, 512>}, {pipeline_mode = #tpu.pipeline_mode<synchronous>, transform_indices = @transform_6, window_bounds = array<i64: 1, 512>}, {pipeline_mode = #tpu.pipeline_mode<synchronous>, transform_indices = @transform_7, window_bounds = array<i64: 512, 128>}, {pipeline_mode = #tpu.pipeline_mode<synchronous>, transform_indices = @transform_8, window_bounds = array<i64: 1, 128>}, {transform_indices = @transform_9, window_bounds = array<i64: 8, 128>}]} {
    %c0 = arith.constant 0 : index
    %c0_0 = arith.constant 0 : index
    %0 = vector.load %arg1[%c0, %c0_0] : memref<8x32xbf16, #tpu.memory_space<vmem>>, vector<8x32xbf16>
    %c0_1 = arith.constant 0 : index
    %c0_2 = arith.constant 0 : index
    %1 = vector.load %arg2[%c0_1, %c0_2] : memref<32x128xbf16, #tpu.memory_space<vmem>>, vector<32x128xbf16>
    %cst = arith.constant dense<0.000000e+00> : vector<8x128xf32>
    %2 = tpu.matmul %0, %1, %cst {dimension_numbers = #tpu.dot_dimension_numbers<[1], [0], [0], [1], [0, 0, 1, 1], [], []>} : vector<8x32xbf16>, vector<32x128xbf16>, vector<8x128xf32> -> vector<8x128xf32>
    %c0_3 = arith.constant 0 : index
    %c0_4 = arith.constant 0 : index
    %3 = vector.load %arg3[%c0_3, %c0_4] : memref<1x128xf32, #tpu.memory_space<vmem>>, vector<1x128xf32>
    %4 = vector.broadcast %3 : vector<1x128xf32> to vector<8x128xf32>
    %5 = arith.addf %2, %4 : vector<8x128xf32>
    %6 = arith.truncf %5 : vector<8x128xf32> to vector<8x128xbf16>
    %cst_5 = arith.constant 0.000000e+00 : bf16
    %7 = vector.broadcast %cst_5 : bf16 to vector<8x128xbf16>
    %8 = arith.cmpf ogt, %6, %7 : vector<8x128xbf16>
    %cst_6 = arith.constant 2.001950e-01 : bf16
    %9 = vector.broadcast %cst_6 : bf16 to vector<8x128xbf16>
    %10 = arith.mulf %9, %6 : vector<8x128xbf16>
    %11 = arith.select %8, %6, %10 : vector<8x128xi1>, vector<8x128xbf16>
    %c0_7 = arith.constant 0 : index
    %c0_8 = arith.constant 0 : index
    %12 = vector.load %arg4[%c0_7, %c0_8] : memref<128x256xbf16, #tpu.memory_space<vmem>>, vector<128x256xbf16>
    %cst_9 = arith.constant dense<0.000000e+00> : vector<8x256xf32>
    %13 = tpu.matmul %11, %12, %cst_9 {dimension_numbers = #tpu.dot_dimension_numbers<[1], [0], [0], [1], [0, 0, 1, 1], [], []>} : vector<8x128xbf16>, vector<128x256xbf16>, vector<8x256xf32> -> vector<8x256xf32>
    %c0_10 = arith.constant 0 : index
    %c0_11 = arith.constant 0 : index
    %14 = vector.load %arg5[%c0_10, %c0_11] : memref<1x256xf32, #tpu.memory_space<vmem>>, vector<1x256xf32>
    %15 = vector.broadcast %14 : vector<1x256xf32> to vector<8x256xf32>
    %16 = arith.addf %13, %15 : vector<8x256xf32>
    %17 = arith.truncf %16 : vector<8x256xf32> to vector<8x256xbf16>
    %cst_12 = arith.constant 0.000000e+00 : bf16
    %18 = vector.broadcast %cst_12 : bf16 to vector<8x256xbf16>
    %19 = arith.cmpf ogt, %17, %18 : vector<8x256xbf16>
    %cst_13 = arith.constant 2.001950e-01 : bf16
    %20 = vector.broadcast %cst_13 : bf16 to vector<8x256xbf16>
    %21 = arith.mulf %20, %17 : vector<8x256xbf16>
    %22 = arith.select %19, %17, %21 : vector<8x256xi1>, vector<8x256xbf16>
    %c0_14 = arith.constant 0 : index
    %c0_15 = arith.constant 0 : index
    %23 = vector.load %arg6[%c0_14, %c0_15] : memref<256x512xbf16, #tpu.memory_space<vmem>>, vector<256x512xbf16>
    %cst_16 = arith.constant dense<0.000000e+00> : vector<8x512xf32>
    %24 = tpu.matmul %22, %23, %cst_16 {dimension_numbers = #tpu.dot_dimension_numbers<[1], [0], [0], [1], [0, 0, 1, 1], [], []>} : vector<8x256xbf16>, vector<256x512xbf16>, vector<8x512xf32> -> vector<8x512xf32>
    %c0_17 = arith.constant 0 : index
    %c0_18 = arith.constant 0 : index
    %25 = vector.load %arg7[%c0_17, %c0_18] : memref<1x512xf32, #tpu.memory_space<vmem>>, vector<1x512xf32>
    %26 = vector.broadcast %25 : vector<1x512xf32> to vector<8x512xf32>
    %27 = arith.addf %24, %26 : vector<8x512xf32>
    %28 = arith.truncf %27 : vector<8x512xf32> to vector<8x512xbf16>
    %cst_19 = arith.constant 0.000000e+00 : bf16
    %29 = vector.broadcast %cst_19 : bf16 to vector<8x512xbf16>
    %30 = arith.cmpf ogt, %28, %29 : vector<8x512xbf16>
    %cst_20 = arith.constant 2.001950e-01 : bf16
    %31 = vector.broadcast %cst_20 : bf16 to vector<8x512xbf16>
    %32 = arith.mulf %31, %28 : vector<8x512xbf16>
    %33 = arith.select %30, %28, %32 : vector<8x512xi1>, vector<8x512xbf16>
    %c0_21 = arith.constant 0 : index
    %c0_22 = arith.constant 0 : index
    %34 = vector.load %arg8[%c0_21, %c0_22] : memref<512x128xbf16, #tpu.memory_space<vmem>>, vector<512x128xbf16>
    %cst_23 = arith.constant dense<0.000000e+00> : vector<8x128xf32>
    %35 = tpu.matmul %33, %34, %cst_23 {dimension_numbers = #tpu.dot_dimension_numbers<[1], [0], [0], [1], [0, 0, 1, 1], [], []>} : vector<8x512xbf16>, vector<512x128xbf16>, vector<8x128xf32> -> vector<8x128xf32>
    %c0_24 = arith.constant 0 : index
    %c0_25 = arith.constant 0 : index
    %36 = vector.load %arg9[%c0_24, %c0_25] : memref<1x128xf32, #tpu.memory_space<vmem>>, vector<1x128xf32>
    %37 = vector.broadcast %36 : vector<1x128xf32> to vector<8x128xf32>
    %38 = arith.addf %35, %37 : vector<8x128xf32>
    %39 = math.tanh %38 : vector<8x128xf32>
    %c0_26 = arith.constant 0 : index
    %c0_27 = arith.constant 0 : index
    %40 = vector.load %arg10[%c0_26, %c0_27] : memref<8x128xf32, #tpu.memory_space<vmem>>, vector<8x128xf32>
    tpu.vector_store %arg10[%c0_26, %c0_27], %39 {strides = array<i32>} : memref<8x128xf32, #tpu.memory_space<vmem>>, vector<8x128xf32>,
    return
  }
  func.func @transform_0(%arg0: i32) -> (i32, i32) {
    %c0_i32 = arith.constant 0 : i32
    %c0_i32_0 = arith.constant 0 : i32
    return %arg0, %c0_i32 : i32, i32
  }
  func.func @transform_1(%arg0: i32) -> (i32, i32) {
    %c0_i32 = arith.constant 0 : i32
    %c0_i32_0 = arith.constant 0 : i32
    %c0_i32_1 = arith.constant 0 : i32
    return %c0_i32, %c0_i32_0 : i32, i32
  }
  func.func @transform_2(%arg0: i32) -> (i32, i32) {
    %c0_i32 = arith.constant 0 : i32
    %c0_i32_0 = arith.constant 0 : i32
    %c0_i32_1 = arith.constant 0 : i32
    return %c0_i32, %c0_i32_0 : i32, i32
  }
  func.func @transform_3(%arg0: i32) -> (i32, i32) {
    %c0_i32 = arith.constant 0 : i32
    %c0_i32_0 = arith.constant 0 : i32
    %c0_i32_1 = arith.constant 0 : i32
    return %c0_i32, %c0_i32_0 : i32, i32
  }
  func.func @transform_4(%arg0: i32) -> (i32, i32) {
    %c0_i32 = arith.constant 0 : i32
    %c0_i32_0 = arith.constant 0 : i32
    %c0_i32_1 = arith.constant 0 : i32
    return %c0_i32, %c0_i32_0 : i32, i32
  }
  func.func @transform_5(%arg0: i32) -> (i32, i32) {
    %c0_i32 = arith.constant 0 : i32
    %c0_i32_0 = arith.constant 0 : i32
    %c0_i32_1 = arith.constant 0 : i32
    return %c0_i32, %c0_i32_0 : i32, i32
  }
  func.func @transform_6(%arg0: i32) -> (i32, i32) {
    %c0_i32 = arith.constant 0 : i32
    %c0_i32_0 = arith.constant 0 : i32
    %c0_i32_1 = arith.constant 0 : i32
    return %c0_i32, %c0_i32_0 : i32, i32
  }
  func.func @transform_7(%arg0: i32) -> (i32, i32) {
    %c0_i32 = arith.constant 0 : i32
    %c0_i32_0 = arith.constant 0 : i32
    %c0_i32_1 = arith.constant 0 : i32
    return %c0_i32, %c0_i32_0 : i32, i32
  }
  func.func @transform_8(%arg0: i32) -> (i32, i32) {
    %c0_i32 = arith.constant 0 : i32
    %c0_i32_0 = arith.constant 0 : i32
    %c0_i32_1 = arith.constant 0 : i32
    return %c0_i32, %c0_i32_0 : i32, i32
  }
  func.func @transform_9(%arg0: i32) -> (i32, i32) {
    %c0_i32 = arith.constant 0 : i32
    %c0_i32_0 = arith.constant 0 : i32
    return %arg0, %c0_i32 : i32, i32
  }
}

</mosaic_0001>

<llo_original>
// kernel: tpu_custom_call.1
$region0: #{tpu_custom_call.1}
  #allocation0 [shape = 'u32[]', space=smem, size = 0x4, offset = 0x4, fixed_abs, tag = 'smem constant byte address 0x4 - core index']
  #allocation1 [shape = 'u32[144,128]{1,0:T(1,128)}', space=vmem, size = 0x12000, scoped, tag = 'internal scratch']
  %s0 = inlined_call_operand.hbm [shape: bf16[8,32], index: 0, kind: input, shape index: {}]
  %s1 = inlined_call_operand.hbm [shape: bf16[32,128], index: 1, kind: input, shape index: {}]
  %s2 = inlined_call_operand.vmem [shape: f32[1,128], index: 2, kind: input, shape index: {}]
  %s3 = inlined_call_operand.hbm [shape: bf16[128,256], index: 3, kind: input, shape index: {}]
  %s4 = inlined_call_operand.vmem [shape: f32[1,256], index: 4, kind: input, shape index: {}]
  %s5 = inlined_call_operand.hbm [shape: bf16[256,512], index: 5, kind: input, shape index: {}]
  %s6 = inlined_call_operand.vmem [shape: f32[1,512], index: 6, kind: input, shape index: {}]
  %s7 = inlined_call_operand.hbm [shape: bf16[512,128], index: 7, kind: input, shape index: {}]
  %s8 = inlined_call_operand.vmem [shape: f32[1,128], index: 8, kind: input, shape index: {}]
  %s9 = inlined_call_operand.hbm [shape: f32[8,128], index: 9, kind: output, shape index: {}]
  %s10 = sld [smem:[#allocation0]]
  $region66: #{tpu_custom_call.1} parent=0
    _
  %s12 = ssub.s32 1, %s10
  %s13 = scalar_select 0, %s12, %s10
  $region1: #{tpu_custom_call.1} parent=0
    #allocation2 [shape = 'u8[2048]{0}', space=vmem, size = 0x800, scoped, tag = 'input window, operand 0, single buffered']
    #allocation3 [shape = 's32[1]{0}', space=sflag, size = 0x4, scoped, tag = 'scoped memory for tpu_custom_call.1']
    #allocation4 [shape = 's32[1]{0}', space=sflag, size = 0x4, scoped, tag = 'scoped memory for tpu_custom_call.1']
    #allocation5 [shape = 'u8[8192]{0}', space=vmem, size = 0x2000, scoped, tag = 'input window, operand 1, single buffered']
    #allocation6 [shape = 's32[1]{0}', space=sflag, size = 0x4, scoped, tag = 'scoped memory for tpu_custom_call.1']
    #allocation7 [shape = 'u8[65536]{0}', space=vmem, size = 0x10000, scoped, tag = 'input window, operand 3, single buffered']
    #allocation8 [shape = 'u8[262144]{0}', space=vmem, size = 0x40000, scoped, tag = 'input window, operand 5, single buffered']
    #allocation9 [shape = 's32[1]{0}', space=sflag, size = 0x4, scoped, tag = 'scoped memory for tpu_custom_call.1']
    #allocation10 [shape = 'u8[131072]{0}', space=vmem, size = 0x20000, scoped, tag = 'input window, operand 7, single buffered']
    #allocation11 [shape = 'u8[4096]{0}', space=vmem, size = 0x1000, scoped, tag = 'output window, operand 0, single buffered']
    %14 = vsyncpa [#allocation3], 0
    %15 = vsyncpa [#allocation6], 0
    %16 = vsyncpa [#allocation9], 0
    %17 = vsyncpa [#allocation4], 0
    // Predicated region
    $region2: #{tpu_custom_call.1} parent=1 // pred_check
      _
    $region3: #{tpu_custom_call.1} parent=1 // pred_check_branch
      %19 = sbr.rel (0) target = $region5
    $region4: #{tpu_custom_call.1} parent=1 // pred_region
      %s21 = ssub.s32 64, 64
      %22 = vsyncadd [#allocation3], %s21
      %s24 = sshll.u32 [#allocation2], 4
      %s25 = int_to_ptr.vmem [resolvable:$true] %s24
      %27 = dma.hbm_to_vmem [thread:$0]  %s0, 64, %s25, [#allocation3]
    $region5: #{tpu_custom_call.1} parent=1 // pred_fallthru
      _
    // Predicated region
    $region6: #{tpu_custom_call.1} parent=1 // pred_check
      _
    $region7: #{tpu_custom_call.1} parent=1 // pred_check_branch
      %29 = sbr.rel (0) target = $region9
    $region8: #{tpu_custom_call.1} parent=1 // pred_region
      %s31 = ssub.s32 256, 256
      %32 = vsyncadd [#allocation6], %s31
      %s33 = sshll.u32 [#allocation5], 4
      %s34 = int_to_ptr.vmem [resolvable:$true] %s33
      %39 = dma.hbm_to_vmem [thread:$0]  %s1, 256, %s34, [#allocation6], 64, 64, 4
    $region9: #{tpu_custom_call.1} parent=1 // pred_fallthru
      _
    // Predicated region
    $region10: #{tpu_custom_call.1} parent=1 // pred_check
      _
    $region11: #{tpu_custom_call.1} parent=1 // pred_check_branch
      %41 = sbr.rel (0) target = $region13
    $region12: #{tpu_custom_call.1} parent=1 // pred_region
      _
    $region13: #{tpu_custom_call.1} parent=1 // pred_fallthru
      _
    // Predicated region
    $region14: #{tpu_custom_call.1} parent=1 // pred_check
      _
    $region15: #{tpu_custom_call.1} parent=1 // pred_check_branch
      %43 = sbr.rel (0) target = $region17
    $region16: #{tpu_custom_call.1} parent=1 // pred_region
      %s45 = ssub.s32 2048, 2048
      %46 = vsyncadd [#allocation6], %s45
      %s47 = sshll.u32 [#allocation7], 4
      %s48 = int_to_ptr.vmem [resolvable:$true] %s47
      %53 = dma.hbm_to_vmem [thread:$0]  %s3, 2048, %s48, [#allocation6], 128, 128, 8
    $region17: #{tpu_custom_call.1} parent=1 // pred_fallthru
      _
    // Predicated region
    $region18: #{tpu_custom_call.1} parent=1 // pred_check
      _
    $region19: #{tpu_custom_call.1} parent=1 // pred_check_branch
      %55 = sbr.rel (0) target = $region21
    $region20: #{tpu_custom_call.1} parent=1 // pred_region
      _
    $region21: #{tpu_custom_call.1} parent=1 // pred_fallthru
      _
    // Predicated region
    $region22: #{tpu_custom_call.1} parent=1 // pred_check
      _
    $region23: #{tpu_custom_call.1} parent=1 // pred_check_branch
      %57 = sbr.rel (0) target = $region25
    $region24: #{tpu_custom_call.1} parent=1 // pred_region
      %s59 = ssub.s32 8192, 8192
      %60 = vsyncadd [#allocation9], %s59
      %s61 = sshll.u32 [#allocation8], 4
      %s62 = int_to_ptr.vmem [resolvable:$true] %s61
      %67 = dma.hbm_to_vmem [thread:$0]  %s5, 8192, %s62, [#allocation9], 256, 256, 16
    $region25: #{tpu_custom_call.1} parent=1 // pred_fallthru
      _
    // Predicated region
    $region26: #{tpu_custom_call.1} parent=1 // pred_check
      _
    $region27: #{tpu_custom_call.1} parent=1 // pred_check_branch
      %69 = sbr.rel (0) target = $region29
    $region28: #{tpu_custom_call.1} parent=1 // pred_region
      _
    $region29: #{tpu_custom_call.1} parent=1 // pred_fallthru
      _
    // Predicated region
    $region30: #{tpu_custom_call.1} parent=1 // pred_check
      _
    $region31: #{tpu_custom_call.1} parent=1 // pred_check_branch
      %71 = sbr.rel (0) target = $region33
    $region32: #{tpu_custom_call.1} parent=1 // pred_region
      %s73 = ssub.s32 4096, 4096
      %74 = vsyncadd [#allocation9], %s73
      %s75 = sshll.u32 [#allocation10], 4
      %s76 = int_to_ptr.vmem [resolvable:$true] %s75
      %81 = dma.hbm_to_vmem [thread:$0]  %s7, 4096, %s76, [#allocation9], 64, 64, 4
    $region33: #{tpu_custom_call.1} parent=1 // pred_fallthru
      _
    // Predicated region
    $region34: #{tpu_custom_call.1} parent=1 // pred_check
      _
    $region35: #{tpu_custom_call.1} parent=1 // pred_check_branch
      %83 = sbr.rel (0) target = $region37
    $region36: #{tpu_custom_call.1} parent=1 // pred_region
      _
    $region37: #{tpu_custom_call.1} parent=1 // pred_fallthru
      _
    // Predicated region
    $region38: #{tpu_custom_call.1} parent=1 // pred_check
      _
    $region39: #{tpu_custom_call.1} parent=1 // pred_check_branch
      %85 = sbr.rel (0) target = $region41
    $region40: #{tpu_custom_call.1} parent=1 // pred_region
      %86 = dma.done [#allocation3], 64
    $region41: #{tpu_custom_call.1} parent=1 // pred_fallthru
      _
    // Predicated region
    $region42: #{tpu_custom_call.1} parent=1 // pred_check
      _
    $region43: #{tpu_custom_call.1} parent=1 // pred_check_branch
      %88 = sbr.rel (0) target = $region45
    $region44: #{tpu_custom_call.1} parent=1 // pred_region
      %89 = dma.done [#allocation6], 256
    $region45: #{tpu_custom_call.1} parent=1 // pred_fallthru
      _
    // Predicated region
    $region46: #{tpu_custom_call.1} parent=1 // pred_check
      _
    $region47: #{tpu_custom_call.1} parent=1 // pred_check_branch
      %91 = sbr.rel (0) target = $region49
    $region48: #{tpu_custom_call.1} parent=1 // pred_region
      %92 = dma.done [#allocation6], 2048
    $region49: #{tpu_custom_call.1} parent=1 // pred_fallthru
      _
    // Predicated region
    $region50: #{tpu_custom_call.1} parent=1 // pred_check
      _
    $region51: #{tpu_custom_call.1} parent=1 // pred_check_branch
      %94 = sbr.rel (0) target = $region53
    $region52: #{tpu_custom_call.1} parent=1 // pred_region
      %95 = dma.done [#allocation9], 8192
    $region53: #{tpu_custom_call.1} parent=1 // pred_fallthru
      _
    // Predicated region
    $region54: #{tpu_custom_call.1} parent=1 // pred_check
      _
    $region55: #{tpu_custom_call.1} parent=1 // pred_check_branch
      %97 = sbr.rel (0) target = $region57
    $region56: #{tpu_custom_call.1} parent=1 // pred_region
      %98 = dma.done [#allocation9], 4096
    $region57: #{tpu_custom_call.1} parent=1 // pred_fallthru
      _
    %v101 = vld [vmem:[#allocation2] sm:$0xf]
    %v102 = vld [vmem:[#allocation5] sm:$0xf]
    %v103 = vld [vmem:[#allocation5 + $0x4] sm:$0xf]
    %v104 = vld [vmem:[#allocation5 + $0x8] sm:$0xf]
    %v105 = vld [vmem:[#allocation5 + $0xc] sm:$0xf]
    %v106 = vld [vmem:[%s2] sm:$0x1]
    %v108 = vlaneseq
    %v109 = vshrl.u32 %v108, 7
    %v110 = vsub.s32 0, %v109
    %v111 = vrot.slane %v106, %v110
    %v117 = vunpack.c.l.b16 %v102
    %v118 = vunpack.c.l.b16 %v103
    %v119 = vunpack.c.l.b16 %v104
    %v120 = vunpack.c.l.b16 %v105
    %v121 = vpack.c.b16 %v118, %v117
    %v122 = vpack.c.b16 %v120, %v119
    %vm125 = vcmask 261120
    %v127 = vsel %vm125, %v101, 0
    %129 = vmatprep.subr.bf16.mxu0 0
    %130 = vmatpush1.bf16.msra.mxu0 %v121
    %131 = vmatprep.subr.bf16.mxu0 0
    %132 = vmatpush1.bf16.msra.mxu0 %v122
    %133 = vmatprep.subr.bf16.mxu0 0
    %134 = vmatpush1.bf16.msra.mxu0 0
    %135 = vmatprep.subr.bf16.mxu0 0
    %136 = vmatpush1.bf16.msra.mxu0 0
    %137 = vmatprep.subr.bf16.mxu0 0
    %138 = vmatpush1.bf16.msra.mxu0 0
    %139 = vmatprep.subr.bf16.mxu0 0
    %140 = vmatpush1.bf16.msra.mxu0 0
    %141 = vmatprep.subr.bf16.mxu0 0
    %142 = vmatpush1.bf16.msra.mxu0 0
    %143 = vmatprep.subr.bf16.mxu0 0
    %144 = vmatpush1.bf16.msra.mxu0 0
    %145 = vmatprep.subr.bf16.mxu0 0
    %146 = vmatpush1.bf16.msra.mxu0 0
    %147 = vmatprep.subr.bf16.mxu0 0
    %148 = vmatpush1.bf16.msra.mxu0 0
    %149 = vmatprep.subr.bf16.mxu0 0
    %150 = vmatpush1.bf16.msra.mxu0 0
    %151 = vmatprep.subr.bf16.mxu0 0
    %152 = vmatpush1.bf16.msra.mxu0 0
    %153 = vmatprep.subr.bf16.mxu0 0
    %154 = vmatpush1.bf16.msra.mxu0 0
    %155 = vmatprep.subr.bf16.mxu0 0
    %156 = vmatpush1.bf16.msra.mxu0 0
    %157 = vmatprep.subr.bf16.mxu0 0
    %158 = vmatpush1.bf16.msra.mxu0 0
    %159 = vmatprep.subr.bf16.mxu0 0
    %160 = vmatpush1.bf16.msra.mxu0 0
    %161 = vmatprep.mubr.bf16.mxu0 0
    %162 = vmatmul.mubr.bf16.gmra.mrb[0].mxu0 %v127
    %v163 = vpop.f32.mrb[0].mxu0
    %v164 = vadd.f32 %v111, %v163
    %v165 = vpop.f32.mrb[0].mxu0
    %v166 = vpop.f32.mrb[0].mxu0
    %v167 = vpop.f32.mrb[0].mxu0
    %168 = vdwg.mxu0
    %v169 = vpack.c.bf16 %v164, %v164
    %vm170 = vcmp.gt.bf16.partialorder %v169, 0
    %v171 = vmul.bf16 %v169, 1045249613
    %v172 = vsel %vm170, %v169, %v171
    %v173 = vld [vmem:[#allocation7] sm:$0xff]
    %v174 = vld [vmem:[#allocation7 + $0x8] sm:$0xff]
    %v175 = vld [vmem:[#allocation7 + $0x10] sm:$0xff]
    %v176 = vld [vmem:[#allocation7 + $0x18] sm:$0xff]
    %v177 = vld [vmem:[#allocation7 + $0x20] sm:$0xff]
    %v178 = vld [vmem:[#allocation7 + $0x28] sm:$0xff]
    %v179 = vld [vmem:[#allocation7 + $0x30] sm:$0xff]
    %v180 = vld [vmem:[#allocation7 + $0x38] sm:$0xff]
    %v181 = vld [vmem:[#allocation7 + $0x40] sm:$0xff]
    %v182 = vld [vmem:[#allocation7 + $0x48] sm:$0xff]
    %v183 = vld [vmem:[#allocation7 + $0x50] sm:$0xff]
    %v184 = vld [vmem:[#allocation7 + $0x58] sm:$0xff]
    %v185 = vld [vmem:[#allocation7 + $0x60] sm:$0xff]
    %v186 = vld [vmem:[#allocation7 + $0x68] sm:$0xff]
    %v187 = vld [vmem:[#allocation7 + $0x70] sm:$0xff]
    %v188 = vld [vmem:[#allocation7 + $0x78] sm:$0xff]
    %v189 = vld [vmem:[%s4] sm:$0x3]
    %v191 = vlaneseq
    %v192 = vshrl.u32 %v191, 7
    %v193 = vsub.s32 0, %v192
    %v194 = vrot.slane %v189, %v193
    %v195 = vlaneseq
    %v196 = vshrl.u32 %v195, 7
    %v197 = vsub.s32 1, %v196
    %v198 = vrot.slane %v189, %v197
    %v217 = vunpack.c.l.b16 %v173
    %v218 = vunpack.c.h.b16 %v173
    %v219 = vunpack.c.l.b16 %v174
    %v220 = vunpack.c.h.b16 %v174
    %v221 = vunpack.c.l.b16 %v175
    %v222 = vunpack.c.h.b16 %v175
    %v223 = vunpack.c.l.b16 %v176
    %v224 = vunpack.c.h.b16 %v176
    %v225 = vunpack.c.l.b16 %v177
    %v226 = vunpack.c.h.b16 %v177
    %v227 = vunpack.c.l.b16 %v178
    %v228 = vunpack.c.h.b16 %v178
    %v229 = vunpack.c.l.b16 %v179
    %v230 = vunpack.c.h.b16 %v179
    %v231 = vunpack.c.l.b16 %v180
    %v232 = vunpack.c.h.b16 %v180
    %v233 = vunpack.c.l.b16 %v181
    %v234 = vunpack.c.h.b16 %v181
    %v235 = vunpack.c.l.b16 %v182
    %v236 = vunpack.c.h.b16 %v182
    %v237 = vunpack.c.l.b16 %v183
    %v238 = vunpack.c.h.b16 %v183
    %v239 = vunpack.c.l.b16 %v184
    %v240 = vunpack.c.h.b16 %v184
    %v241 = vunpack.c.l.b16 %v185
    %v242 = vunpack.c.h.b16 %v185
    %v243 = vunpack.c.l.b16 %v186
    %v244 = vunpack.c.h.b16 %v186
    %v245 = vunpack.c.l.b16 %v187
    %v246 = vunpack.c.h.b16 %v187
    %v247 = vunpack.c.l.b16 %v188
    %v248 = vunpack.c.h.b16 %v188
    %v249 = vpack.c.b16 %v219, %v217
    %v250 = vpack.c.b16 %v220, %v218
    %v251 = vpack.c.b16 %v223, %v221
    %v252 = vpack.c.b16 %v224, %v222
    %v253 = vpack.c.b16 %v227, %v225
    %v254 = vpack.c.b16 %v228, %v226
    %v255 = vpack.c.b16 %v231, %v229
    %v256 = vpack.c.b16 %v232, %v230
    %v257 = vpack.c.b16 %v235, %v233
    %v258 = vpack.c.b16 %v236, %v234
    %v259 = vpack.c.b16 %v239, %v237
    %v260 = vpack.c.b16 %v240, %v238
    %v261 = vpack.c.b16 %v243, %v241
    %v262 = vpack.c.b16 %v244, %v242
    %v263 = vpack.c.b16 %v247, %v245
    %v264 = vpack.c.b16 %v248, %v246
    %281 = vmatprep.subr.bf16.mxu0 %v250
    %282 = vmatpush1.bf16.msra.mxu0 %v249
    %283 = vmatprep.subr.bf16.mxu0 %v252
    %284 = vmatpush1.bf16.msra.mxu0 %v251
    %285 = vmatprep.subr.bf16.mxu0 %v254
    %286 = vmatpush1.bf16.msra.mxu0 %v253
    %287 = vmatprep.subr.bf16.mxu0 %v256
    %288 = vmatpush1.bf16.msra.mxu0 %v255
    %289 = vmatprep.subr.bf16.mxu0 %v258
    %290 = vmatpush1.bf16.msra.mxu0 %v257
    %291 = vmatprep.subr.bf16.mxu0 %v260
    %292 = vmatpush1.bf16.msra.mxu0 %v259
    %293 = vmatprep.subr.bf16.mxu0 %v262
    %294 = vmatpush1.bf16.msra.mxu0 %v261
    %295 = vmatprep.subr.bf16.mxu0 %v264
    %296 = vmatpush1.bf16.msra.mxu0 %v263
    %297 = vmatprep.subr.bf16.mxu0 0
    %298 = vmatpush1.bf16.msra.mxu0 0
    %299 = vmatprep.subr.bf16.mxu0 0
    %300 = vmatpush1.bf16.msra.mxu0 0
    %301 = vmatprep.subr.bf16.mxu0 0
    %302 = vmatpush1.bf16.msra.mxu0 0
    %303 = vmatprep.subr.bf16.mxu0 0
    %304 = vmatpush1.bf16.msra.mxu0 0
    %305 = vmatprep.subr.bf16.mxu0 0
    %306 = vmatpush1.bf16.msra.mxu0 0
    %307 = vmatprep.subr.bf16.mxu0 0
    %308 = vmatpush1.bf16.msra.mxu0 0
    %309 = vmatprep.subr.bf16.mxu0 0
    %310 = vmatpush1.bf16.msra.mxu0 0
    %311 = vmatprep.subr.bf16.mxu0 0
    %312 = vmatpush1.bf16.msra.mxu0 0
    %313 = vmatprep.mubr.bf16.mxu0 0
    %314 = vmatmul.mubr.bf16.gmra.mrb[0].mxu0 %v172
    %v315 = vpop.f32.mrb[0].mxu0
    %v316 = vadd.f32 %v194, %v315
    %v317 = vpop.f32.mrb[0].mxu0
    %v318 = vadd.f32 %v198, %v317
    %v319 = vpop.f32.mrb[0].mxu0
    %v320 = vpop.f32.mrb[0].mxu0
    %321 = vdwg.mxu0
    %v322 = vpack.c.bf16 %v316, %v316
    %v323 = vpack.c.bf16 %v318, %v318
    %vm324 = vcmp.gt.bf16.partialorder %v322, 0
    %vm325 = vcmp.gt.bf16.partialorder %v323, 0
    %v326 = vmul.bf16 %v322, 1045249613
    %v327 = vmul.bf16 %v323, 1045249613
    %v328 = vsel %vm324, %v322, %v326
    %v329 = vsel %vm325, %v323, %v327
    %v330 = vld [vmem:[#allocation8] sm:$0xff]
    %v331 = vld [vmem:[#allocation8 + $0x8] sm:$0xff]
    %v332 = vld [vmem:[#allocation8 + $0x10] sm:$0xff]
    %v333 = vld [vmem:[#allocation8 + $0x18] sm:$0xff]
    %v334 = vld [vmem:[#allocation8 + $0x20] sm:$0xff]
    %v335 = vld [vmem:[#allocation8 + $0x28] sm:$0xff]
    %v336 = vld [vmem:[#allocation8 + $0x30] sm:$0xff]
    %v337 = vld [vmem:[#allocation8 + $0x38] sm:$0xff]
    %v338 = vld [vmem:[#allocation8 + $0x40] sm:$0xff]
    %v339 = vld [vmem:[#allocation8 + $0x48] sm:$0xff]
    %v340 = vld [vmem:[#allocation8 + $0x50] sm:$0xff]
    %v341 = vld [vmem:[#allocation8 + $0x58] sm:$0xff]
    %v342 = vld [vmem:[#allocation8 + $0x60] sm:$0xff]
    %v343 = vld [vmem:[#allocation8 + $0x68] sm:$0xff]
    %v344 = vld [vmem:[#allocation8 + $0x70] sm:$0xff]
    %v345 = vld [vmem:[#allocation8 + $0x78] sm:$0xff]
    %v346 = vld [vmem:[#allocation8 + $0x80] sm:$0xff]
    %v347 = vld [vmem:[#allocation8 + $0x88] sm:$0xff]
    %v348 = vld [vmem:[#allocation8 + $0x90] sm:$0xff]
    %v349 = vld [vmem:[#allocation8 + $0x98] sm:$0xff]
    %v350 = vld [vmem:[#allocation8 + $0xa0] sm:$0xff]
    %v351 = vld [vmem:[#allocation8 + $0xa8] sm:$0xff]
    %v352 = vld [vmem:[#allocation8 + $0xb0] sm:$0xff]
    %v353 = vld [vmem:[#allocation8 + $0xb8] sm:$0xff]
    %v354 = vld [vmem:[#allocation8 + $0xc0] sm:$0xff]
    %v355 = vld [vmem:[#allocation8 + $0xc8] sm:$0xff]
    %v356 = vld [vmem:[#allocation8 + $0xd0] sm:$0xff]
    %v357 = vld [vmem:[#allocation8 + $0xd8] sm:$0xff]
    %v358 = vld [vmem:[#allocation8 + $0xe0] sm:$0xff]
    %v359 = vld [vmem:[#allocation8 + $0xe8] sm:$0xff]
    %v360 = vld [vmem:[#allocation8 + $0xf0] sm:$0xff]
    %v361 = vld [vmem:[#allocation8 + $0xf8] sm:$0xff]
    %v362 = vld [vmem:[#allocation8 + $0x100] sm:$0xff]
    %v363 = vld [vmem:[#allocation8 + $0x108] sm:$0xff]
    %v364 = vld [vmem:[#allocation8 + $0x110] sm:$0xff]
    %v365 = vld [vmem:[#allocation8 + $0x118] sm:$0xff]
    %v366 = vld [vmem:[#allocation8 + $0x120] sm:$0xff]
    %v367 = vld [vmem:[#allocation8 + $0x128] sm:$0xff]
    %v368 = vld [vmem:[#allocation8 + $0x130] sm:$0xff]
    %v369 = vld [vmem:[#allocation8 + $0x138] sm:$0xff]
    %v370 = vld [vmem:[#allocation8 + $0x140] sm:$0xff]
    %v371 = vld [vmem:[#allocation8 + $0x148] sm:$0xff]
    %v372 = vld [vmem:[#allocation8 + $0x150] sm:$0xff]
    %v373 = vld [vmem:[#allocation8 + $0x158] sm:$0xff]
    %v374 = vld [vmem:[#allocation8 + $0x160] sm:$0xff]
    %v375 = vld [vmem:[#allocation8 + $0x168] sm:$0xff]
    %v376 = vld [vmem:[#allocation8 + $0x170] sm:$0xff]
    %v377 = vld [vmem:[#allocation8 + $0x178] sm:$0xff]
    %v378 = vld [vmem:[#allocation8 + $0x180] sm:$0xff]
    %v379 = vld [vmem:[#allocation8 + $0x188] sm:$0xff]
    %v380 = vld [vmem:[#allocation8 + $0x190] sm:$0xff]
    %v381 = vld [vmem:[#allocation8 + $0x198] sm:$0xff]
    %v382 = vld [vmem:[#allocation8 + $0x1a0] sm:$0xff]
    %v383 = vld [vmem:[#allocation8 + $0x1a8] sm:$0xff]
    %v384 = vld [vmem:[#allocation8 + $0x1b0] sm:$0xff]
    %v385 = vld [vmem:[#allocation8 + $0x1b8] sm:$0xff]
    %v386 = vld [vmem:[#allocation8 + $0x1c0] sm:$0xff]
    %v387 = vld [vmem:[#allocation8 + $0x1c8] sm:$0xff]
    %v388 = vld [vmem:[#allocation8 + $0x1d0] sm:$0xff]
    %v389 = vld [vmem:[#allocation8 + $0x1d8] sm:$0xff]
    %v390 = vld [vmem:[#allocation8 + $0x1e0] sm:$0xff]
    %v391 = vld [vmem:[#allocation8 + $0x1e8] sm:$0xff]
    %v392 = vld [vmem:[#allocation8 + $0x1f0] sm:$0xff]
    %v393 = vld [vmem:[#allocation8 + $0x1f8] sm:$0xff]
    %v394 = vld [vmem:[%s6] sm:$0xf]
    %v396 = vlaneseq
    %v397 = vshrl.u32 %v396, 7
    %v398 = vsub.s32 0, %v397
    %v399 = vrot.slane %v394, %v398
    %v400 = vlaneseq
    %v401 = vshrl.u32 %v400, 7
    %v402 = vsub.s32 1, %v401
    %v403 = vrot.slane %v394, %v402
    %v404 = vlaneseq
    %v405 = vshrl.u32 %v404, 7
    %v406 = vsub.s32 2, %v405
    %v407 = vrot.slane %v394, %v406
    %v408 = vlaneseq
    %v409 = vshrl.u32 %v408, 7
    %v410 = vsub.s32 3, %v409
    %v411 = vrot.slane %v394, %v410
    %v480 = vunpack.c.l.b16 %v330
    %v481 = vunpack.c.h.b16 %v330
    %v482 = vunpack.c.l.b16 %v331
    %v483 = vunpack.c.h.b16 %v331
    %v484 = vunpack.c.l.b16 %v332
    %v485 = vunpack.c.h.b16 %v332
    %v486 = vunpack.c.l.b16 %v333
    %v487 = vunpack.c.h.b16 %v333
    %v488 = vunpack.c.l.b16 %v334
    %v489 = vunpack.c.h.b16 %v334
    %v490 = vunpack.c.l.b16 %v335
    %v491 = vunpack.c.h.b16 %v335
    %v492 = vunpack.c.l.b16 %v336
    %v493 = vunpack.c.h.b16 %v336
    %v494 = vunpack.c.l.b16 %v337
    %v495 = vunpack.c.h.b16 %v337
    %v496 = vunpack.c.l.b16 %v338
    %v497 = vunpack.c.h.b16 %v338
    %v498 = vunpack.c.l.b16 %v339
    %v499 = vunpack.c.h.b16 %v339
    %v500 = vunpack.c.l.b16 %v340
    %v501 = vunpack.c.h.b16 %v340
    %v502 = vunpack.c.l.b16 %v341
    %v503 = vunpack.c.h.b16 %v341
    %v504 = vunpack.c.l.b16 %v342
    %v505 = vunpack.c.h.b16 %v342
    %v506 = vunpack.c.l.b16 %v343
    %v507 = vunpack.c.h.b16 %v343
    %v508 = vunpack.c.l.b16 %v344
    %v509 = vunpack.c.h.b16 %v344
    %v510 = vunpack.c.l.b16 %v345
    %v511 = vunpack.c.h.b16 %v345
    %v512 = vunpack.c.l.b16 %v346
    %v513 = vunpack.c.h.b16 %v346
    %v514 = vunpack.c.l.b16 %v347
    %v515 = vunpack.c.h.b16 %v347
    %v516 = vunpack.c.l.b16 %v348
    %v517 = vunpack.c.h.b16 %v348
    %v518 = vunpack.c.l.b16 %v349
    %v519 = vunpack.c.h.b16 %v349
    %v520 = vunpack.c.l.b16 %v350
    %v521 = vunpack.c.h.b16 %v350
    %v522 = vunpack.c.l.b16 %v351
    %v523 = vunpack.c.h.b16 %v351
    %v524 = vunpack.c.l.b16 %v352
    %v525 = vunpack.c.h.b16 %v352
    %v526 = vunpack.c.l.b16 %v353
    %v527 = vunpack.c.h.b16 %v353
    %v528 = vunpack.c.l.b16 %v354
    %v529 = vunpack.c.h.b16 %v354
    %v530 = vunpack.c.l.b16 %v355
    %v531 = vunpack.c.h.b16 %v355
    %v532 = vunpack.c.l.b16 %v356
    %v533 = vunpack.c.h.b16 %v356
    %v534 = vunpack.c.l.b16 %v357
    %v535 = vunpack.c.h.b16 %v357
    %v536 = vunpack.c.l.b16 %v358
    %v537 = vunpack.c.h.b16 %v358
    %v538 = vunpack.c.l.b16 %v359
    %v539 = vunpack.c.h.b16 %v359
    %v540 = vunpack.c.l.b16 %v360
    %v541 = vunpack.c.h.b16 %v360
    %v542 = vunpack.c.l.b16 %v361
    %v543 = vunpack.c.h.b16 %v361
    %v544 = vunpack.c.l.b16 %v362
    %v545 = vunpack.c.h.b16 %v362
    %v546 = vunpack.c.l.b16 %v363
    %v547 = vunpack.c.h.b16 %v363
    %v548 = vunpack.c.l.b16 %v364
    %v549 = vunpack.c.h.b16 %v364
    %v550 = vunpack.c.l.b16 %v365
    %v551 = vunpack.c.h.b16 %v365
    %v552 = vunpack.c.l.b16 %v366
    %v553 = vunpack.c.h.b16 %v366
    %v554 = vunpack.c.l.b16 %v367
    %v555 = vunpack.c.h.b16 %v367
    %v556 = vunpack.c.l.b16 %v368
    %v557 = vunpack.c.h.b16 %v368
    %v558 = vunpack.c.l.b16 %v369
    %v559 = vunpack.c.h.b16 %v369
    %v560 = vunpack.c.l.b16 %v370
    %v561 = vunpack.c.h.b16 %v370
    %v562 = vunpack.c.l.b16 %v371
    %v563 = vunpack.c.h.b16 %v371
    %v564 = vunpack.c.l.b16 %v372
    %v565 = vunpack.c.h.b16 %v372
    %v566 = vunpack.c.l.b16 %v373
    %v567 = vunpack.c.h.b16 %v373
    %v568 = vunpack.c.l.b16 %v374
    %v569 = vunpack.c.h.b16 %v374
    %v570 = vunpack.c.l.b16 %v375
    %v571 = vunpack.c.h.b16 %v375
    %v572 = vunpack.c.l.b16 %v376
    %v573 = vunpack.c.h.b16 %v376
    %v574 = vunpack.c.l.b16 %v377
    %v575 = vunpack.c.h.b16 %v377
    %v576 = vunpack.c.l.b16 %v378
    %v577 = vunpack.c.h.b16 %v378
    %v578 = vunpack.c.l.b16 %v379
    %v579 = vunpack.c.h.b16 %v379
    %v580 = vunpack.c.l.b16 %v380
    %v581 = vunpack.c.h.b16 %v380
    %v582 = vunpack.c.l.b16 %v381
    %v583 = vunpack.c.h.b16 %v381
    %v584 = vunpack.c.l.b16 %v382
    %v585 = vunpack.c.h.b16 %v382
    %v586 = vunpack.c.l.b16 %v383
    %v587 = vunpack.c.h.b16 %v383
    %v588 = vunpack.c.l.b16 %v384
    %v589 = vunpack.c.h.b16 %v384
    %v590 = vunpack.c.l.b16 %v385
    %v591 = vunpack.c.h.b16 %v385
    %v592 = vunpack.c.l.b16 %v386
    %v593 = vunpack.c.h.b16 %v386
    %v594 = vunpack.c.l.b16 %v387
    %v595 = vunpack.c.h.b16 %v387
    %v596 = vunpack.c.l.b16 %v388
    %v597 = vunpack.c.h.b16 %v388
    %v598 = vunpack.c.l.b16 %v389
    %v599 = vunpack.c.h.b16 %v389
    %v600 = vunpack.c.l.b16 %v390
    %v601 = vunpack.c.h.b16 %v390
    %v602 = vunpack.c.l.b16 %v391
    %v603 = vunpack.c.h.b16 %v391
    %v604 = vunpack.c.l.b16 %v392
    %v605 = vunpack.c.h.b16 %v392
    %v606 = vunpack.c.l.b16 %v393
    %v607 = vunpack.c.h.b16 %v393
    %v608 = vpack.c.b16 %v484, %v480
    %v609 = vpack.c.b16 %v485, %v481
    %v610 = vpack.c.b16 %v486, %v482
    %v611 = vpack.c.b16 %v487, %v483
    %v612 = vpack.c.b16 %v492, %v488
    %v613 = vpack.c.b16 %v493, %v489
    %v614 = vpack.c.b16 %v494, %v490
    %v615 = vpack.c.b16 %v495, %v491
    %v616 = vpack.c.b16 %v500, %v496
    %v617 = vpack.c.b16 %v501, %v497
    %v618 = vpack.c.b16 %v502, %v498
    %v619 = vpack.c.b16 %v503, %v499
    %v620 = vpack.c.b16 %v508, %v504
    %v621 = vpack.c.b16 %v509, %v505
    %v622 = vpack.c.b16 %v510, %v506
    %v623 = vpack.c.b16 %v511, %v507
    %v624 = vpack.c.b16 %v516, %v512
    %v625 = vpack.c.b16 %v517, %v513
    %v626 = vpack.c.b16 %v518, %v514
    %v627 = vpack.c.b16 %v519, %v515
    %v628 = vpack.c.b16 %v524, %v520
    %v629 = vpack.c.b16 %v525, %v521
    %v630 = vpack.c.b16 %v526, %v522
    %v631 = vpack.c.b16 %v527, %v523
    %v632 = vpack.c.b16 %v532, %v528
    %v633 = vpack.c.b16 %v533, %v529
    %v634 = vpack.c.b16 %v534, %v530
    %v635 = vpack.c.b16 %v535, %v531
    %v636 = vpack.c.b16 %v540, %v536
    %v637 = vpack.c.b16 %v541, %v537
    %v638 = vpack.c.b16 %v542, %v538
    %v639 = vpack.c.b16 %v543, %v539
    %v640 = vpack.c.b16 %v548, %v544
    %v641 = vpack.c.b16 %v549, %v545
    %v642 = vpack.c.b16 %v550, %v546
    %v643 = vpack.c.b16 %v551, %v547
    %v644 = vpack.c.b16 %v556, %v552
    %v645 = vpack.c.b16 %v557, %v553
    %v646 = vpack.c.b16 %v558, %v554
    %v647 = vpack.c.b16 %v559, %v555
    %v648 = vpack.c.b16 %v564, %v560
    %v649 = vpack.c.b16 %v565, %v561
    %v650 = vpack.c.b16 %v566, %v562
    %v651 = vpack.c.b16 %v567, %v563
    %v652 = vpack.c.b16 %v572, %v568
    %v653 = vpack.c.b16 %v573, %v569
    %v654 = vpack.c.b16 %v574, %v570
    %v655 = vpack.c.b16 %v575, %v571
    %v656 = vpack.c.b16 %v580, %v576
    %v657 = vpack.c.b16 %v581, %v577
    %v658 = vpack.c.b16 %v582, %v578
    %v659 = vpack.c.b16 %v583, %v579
    %v660 = vpack.c.b16 %v588, %v584
    %v661 = vpack.c.b16 %v589, %v585
    %v662 = vpack.c.b16 %v590, %v586
    %v663 = vpack.c.b16 %v591, %v587
    %v664 = vpack.c.b16 %v596, %v592
    %v665 = vpack.c.b16 %v597, %v593
    %v666 = vpack.c.b16 %v598, %v594
    %v667 = vpack.c.b16 %v599, %v595
    %v668 = vpack.c.b16 %v604, %v600
    %v669 = vpack.c.b16 %v605, %v601
    %v670 = vpack.c.b16 %v606, %v602
    %v671 = vpack.c.b16 %v607, %v603
    %736 = vmatprep.subr.bf16.mxu0 %v609
    %737 = vmatpush1.bf16.msra.mxu0 %v608
    %738 = vmatprep.subr.bf16.mxu0 %v613
    %739 = vmatpush1.bf16.msra.mxu0 %v612
    %740 = vmatprep.subr.bf16.mxu0 %v617
    %741 = vmatpush1.bf16.msra.mxu0 %v616
    %742 = vmatprep.subr.bf16.mxu0 %v621
    %743 = vmatpush1.bf16.msra.mxu0 %v620
    %744 = vmatprep.subr.bf16.mxu0 %v625
    %745 = vmatpush1.bf16.msra.mxu0 %v624
    %746 = vmatprep.subr.bf16.mxu0 %v629
    %747 = vmatpush1.bf16.msra.mxu0 %v628
    %748 = vmatprep.subr.bf16.mxu0 %v633
    %749 = vmatpush1.bf16.msra.mxu0 %v632
    %750 = vmatprep.subr.bf16.mxu0 %v637
    %751 = vmatpush1.bf16.msra.mxu0 %v636
    %752 = vmatprep.subr.bf16.mxu0 %v641
    %753 = vmatpush1.bf16.msra.mxu0 %v640
    %754 = vmatprep.subr.bf16.mxu0 %v645
    %755 = vmatpush1.bf16.msra.mxu0 %v644
    %756 = vmatprep.subr.bf16.mxu0 %v649
    %757 = vmatpush1.bf16.msra.mxu0 %v648
    %758 = vmatprep.subr.bf16.mxu0 %v653
    %759 = vmatpush1.bf16.msra.mxu0 %v652
    %760 = vmatprep.subr.bf16.mxu0 %v657
    %761 = vmatpush1.bf16.msra.mxu0 %v656
    %762 = vmatprep.subr.bf16.mxu0 %v661
    %763 = vmatpush1.bf16.msra.mxu0 %v660
    %764 = vmatprep.subr.bf16.mxu0 %v665
    %765 = vmatpush1.bf16.msra.mxu0 %v664
    %766 = vmatprep.subr.bf16.mxu0 %v669
    %767 = vmatpush1.bf16.msra.mxu0 %v668
    %768 = vmatprep.mubr.bf16.mxu0 %v329
    %769 = vmatmul.mubr.bf16.gmra.mrb[0].mxu0 %v328
    %v770 = vpop.f32.mrb[0].mxu0
    %v771 = vadd.f32 %v399, %v770
    %v772 = vpop.f32.mrb[0].mxu0
    %v773 = vadd.f32 %v403, %v772
    %v774 = vpop.f32.mrb[0].mxu0
    %v775 = vpop.f32.mrb[0].mxu0
    %776 = vdwg.mxu0
    %777 = vmatprep.subr.bf16.mxu0 %v611
    %778 = vmatpush1.bf16.msra.mxu0 %v610
    %779 = vmatprep.subr.bf16.mxu0 %v615
    %780 = vmatpush1.bf16.msra.mxu0 %v614
    %781 = vmatprep.subr.bf16.mxu0 %v619
    %782 = vmatpush1.bf16.msra.mxu0 %v618
    %783 = vmatprep.subr.bf16.mxu0 %v623
    %784 = vmatpush1.bf16.msra.mxu0 %v622
    %785 = vmatprep.subr.bf16.mxu0 %v627
    %786 = vmatpush1.bf16.msra.mxu0 %v626
    %787 = vmatprep.subr.bf16.mxu0 %v631
    %788 = vmatpush1.bf16.msra.mxu0 %v630
    %789 = vmatprep.subr.bf16.mxu0 %v635
    %790 = vmatpush1.bf16.msra.mxu0 %v634
    %791 = vmatprep.subr.bf16.mxu0 %v639
    %792 = vmatpush1.bf16.msra.mxu0 %v638
    %793 = vmatprep.subr.bf16.mxu0 %v643
    %794 = vmatpush1.bf16.msra.mxu0 %v642
    %795 = vmatprep.subr.bf16.mxu0 %v647
    %796 = vmatpush1.bf16.msra.mxu0 %v646
    %797 = vmatprep.subr.bf16.mxu0 %v651
    %798 = vmatpush1.bf16.msra.mxu0 %v650
    %799 = vmatprep.subr.bf16.mxu0 %v655
    %800 = vmatpush1.bf16.msra.mxu0 %v654
    %801 = vmatprep.subr.bf16.mxu0 %v659
    %802 = vmatpush1.bf16.msra.mxu0 %v658
    %803 = vmatprep.subr.bf16.mxu0 %v663
    %804 = vmatpush1.bf16.msra.mxu0 %v662
    %805 = vmatprep.subr.bf16.mxu0 %v667
    %806 = vmatpush1.bf16.msra.mxu0 %v666
    %807 = vmatprep.subr.bf16.mxu0 %v671
    %808 = vmatpush1.bf16.msra.mxu0 %v670
    %809 = vmatprep.mubr.bf16.mxu0 %v329
    %810 = vmatmul.mubr.bf16.gmra.mrb[0].mxu0 %v328
    %v811 = vpop.f32.mrb[0].mxu0
    %v812 = vadd.f32 %v407, %v811
    %v813 = vpop.f32.mrb[0].mxu0
    %v814 = vadd.f32 %v411, %v813
    %v815 = vpop.f32.mrb[0].mxu0
    %v816 = vpop.f32.mrb[0].mxu0
    %817 = vdwg.mxu0
    %v818 = vpack.c.bf16 %v771, %v771
    %v819 = vpack.c.bf16 %v773, %v773
    %v820 = vpack.c.bf16 %v812, %v812
    %v821 = vpack.c.bf16 %v814, %v814
    %vm822 = vcmp.gt.bf16.partialorder %v818, 0
    %vm823 = vcmp.gt.bf16.partialorder %v819, 0
    %vm824 = vcmp.gt.bf16.partialorder %v820, 0
    %vm825 = vcmp.gt.bf16.partialorder %v821, 0
    %v826 = vmul.bf16 %v818, 1045249613
    %v827 = vmul.bf16 %v819, 1045249613
    %v828 = vmul.bf16 %v820, 1045249613
    %v829 = vmul.bf16 %v821, 1045249613
    %v830 = vsel %vm822, %v818, %v826
    %v831 = vsel %vm823, %v819, %v827
    %v832 = vsel %vm824, %v820, %v828
    %v833 = vsel %vm825, %v821, %v829
    %v834 = vld [vmem:[#allocation10] sm:$0xf]
    %v835 = vld [vmem:[#allocation10 + $0x4] sm:$0xf]
    %v836 = vld [vmem:[#allocation10 + $0x8] sm:$0xf]
    %v837 = vld [vmem:[#allocation10 + $0xc] sm:$0xf]
    %v838 = vld [vmem:[#allocation10 + $0x10] sm:$0xf]
    %v839 = vld [vmem:[#allocation10 + $0x14] sm:$0xf]
    %v840 = vld [vmem:[#allocation10 + $0x18] sm:$0xf]
    %v841 = vld [vmem:[#allocation10 + $0x1c] sm:$0xf]
    %v842 = vld [vmem:[#allocation10 + $0x20] sm:$0xf]
    %v843 = vld [vmem:[#allocation10 + $0x24] sm:$0xf]
    %v844 = vld [vmem:[#allocation10 + $0x28] sm:$0xf]
    %v845 = vld [vmem:[#allocation10 + $0x2c] sm:$0xf]
    %v846 = vld [vmem:[#allocation10 + $0x30] sm:$0xf]
    %v847 = vld [vmem:[#allocation10 + $0x34] sm:$0xf]
    %v848 = vld [vmem:[#allocation10 + $0x38] sm:$0xf]
    %v849 = vld [vmem:[#allocation10 + $0x3c] sm:$0xf]
    %v850 = vld [vmem:[#allocation10 + $0x40] sm:$0xf]
    %v851 = vld [vmem:[#allocation10 + $0x44] sm:$0xf]
    %v852 = vld [vmem:[#allocation10 + $0x48] sm:$0xf]
    %v853 = vld [vmem:[#allocation10 + $0x4c] sm:$0xf]
    %v854 = vld [vmem:[#allocation10 + $0x50] sm:$0xf]
    %v855 = vld [vmem:[#allocation10 + $0x54] sm:$0xf]
    %v856 = vld [vmem:[#allocation10 + $0x58] sm:$0xf]
    %v857 = vld [vmem:[#allocation10 + $0x5c] sm:$0xf]
    %v858 = vld [vmem:[#allocation10 + $0x60] sm:$0xf]
    %v859 = vld [vmem:[#allocation10 + $0x64] sm:$0xf]
    %v860 = vld [vmem:[#allocation10 + $0x68] sm:$0xf]
    %v861 = vld [vmem:[#allocation10 + $0x6c] sm:$0xf]
    %v862 = vld [vmem:[#allocation10 + $0x70] sm:$0xf]
    %v863 = vld [vmem:[#allocation10 + $0x74] sm:$0xf]
    %v864 = vld [vmem:[#allocation10 + $0x78] sm:$0xf]
    %v865 = vld [vmem:[#allocation10 + $0x7c] sm:$0xf]
    %v866 = vld [vmem:[#allocation10 + $0x80] sm:$0xf]
    %v867 = vld [vmem:[#allocation10 + $0x84] sm:$0xf]
    %v868 = vld [vmem:[#allocation10 + $0x88] sm:$0xf]
    %v869 = vld [vmem:[#allocation10 + $0x8c] sm:$0xf]
    %v870 = vld [vmem:[#allocation10 + $0x90] sm:$0xf]
    %v871 = vld [vmem:[#allocation10 + $0x94] sm:$0xf]
    %v872 = vld [vmem:[#allocation10 + $0x98] sm:$0xf]
    %v873 = vld [vmem:[#allocation10 + $0x9c] sm:$0xf]
    %v874 = vld [vmem:[#allocation10 + $0xa0] sm:$0xf]
    %v875 = vld [vmem:[#allocation10 + $0xa4] sm:$0xf]
    %v876 = vld [vmem:[#allocation10 + $0xa8] sm:$0xf]
    %v877 = vld [vmem:[#allocation10 + $0xac] sm:$0xf]
    %v878 = vld [vmem:[#allocation10 + $0xb0] sm:$0xf]
    %v879 = vld [vmem:[#allocation10 + $0xb4] sm:$0xf]
    %v880 = vld [vmem:[#allocation10 + $0xb8] sm:$0xf]
    %v881 = vld [vmem:[#allocation10 + $0xbc] sm:$0xf]
    %v882 = vld [vmem:[#allocation10 + $0xc0] sm:$0xf]
    %v883 = vld [vmem:[#allocation10 + $0xc4] sm:$0xf]
    %v884 = vld [vmem:[#allocation10 + $0xc8] sm:$0xf]
    %v885 = vld [vmem:[#allocation10 + $0xcc] sm:$0xf]
    %v886 = vld [vmem:[#allocation10 + $0xd0] sm:$0xf]
    %v887 = vld [vmem:[#allocation10 + $0xd4] sm:$0xf]
    %v888 = vld [vmem:[#allocation10 + $0xd8] sm:$0xf]
    %v889 = vld [vmem:[#allocation10 + $0xdc] sm:$0xf]
    %v890 = vld [vmem:[#allocation10 + $0xe0] sm:$0xf]
    %v891 = vld [vmem:[#allocation10 + $0xe4] sm:$0xf]
    %v892 = vld [vmem:[#allocation10 + $0xe8] sm:$0xf]
    %v893 = vld [vmem:[#allocation10 + $0xec] sm:$0xf]
    %v894 = vld [vmem:[#allocation10 + $0xf0] sm:$0xf]
    %v895 = vld [vmem:[#allocation10 + $0xf4] sm:$0xf]
    %v896 = vld [vmem:[#allocation10 + $0xf8] sm:$0xf]
    %v897 = vld [vmem:[#allocation10 + $0xfc] sm:$0xf]
    %v898 = vld [vmem:[%s8] sm:$0x1]
    %v900 = vlaneseq
    %v901 = vshrl.u32 %v900, 7
    %v902 = vsub.s32 0, %v901
    %v903 = vrot.slane %v898, %v902
    %v969 = vunpack.c.l.b16 %v834
    %v970 = vunpack.c.l.b16 %v835
    %v971 = vunpack.c.l.b16 %v836
    %v972 = vunpack.c.l.b16 %v837
    %v973 = vunpack.c.l.b16 %v838
    %v974 = vunpack.c.l.b16 %v839
    %v975 = vunpack.c.l.b16 %v840
    %v976 = vunpack.c.l.b16 %v841
    %v977 = vunpack.c.l.b16 %v842
    %v978 = vunpack.c.l.b16 %v843
    %v979 = vunpack.c.l.b16 %v844
    %v980 = vunpack.c.l.b16 %v845
    %v981 = vunpack.c.l.b16 %v846
    %v982 = vunpack.c.l.b16 %v847
    %v983 = vunpack.c.l.b16 %v848
    %v984 = vunpack.c.l.b16 %v849
    %v985 = vunpack.c.l.b16 %v850
    %v986 = vunpack.c.l.b16 %v851
    %v987 = vunpack.c.l.b16 %v852
    %v988 = vunpack.c.l.b16 %v853
    %v989 = vunpack.c.l.b16 %v854
    %v990 = vunpack.c.l.b16 %v855
    %v991 = vunpack.c.l.b16 %v856
    %v992 = vunpack.c.l.b16 %v857
    %v993 = vunpack.c.l.b16 %v858
    %v994 = vunpack.c.l.b16 %v859
    %v995 = vunpack.c.l.b16 %v860
    %v996 = vunpack.c.l.b16 %v861
    %v997 = vunpack.c.l.b16 %v862
    %v998 = vunpack.c.l.b16 %v863
    %v999 = vunpack.c.l.b16 %v864
    %v1000 = vunpack.c.l.b16 %v865
    %v1001 = vunpack.c.l.b16 %v866
    %v1002 = vunpack.c.l.b16 %v867
    %v1003 = vunpack.c.l.b16 %v868
    %v1004 = vunpack.c.l.b16 %v869
    %v1005 = vunpack.c.l.b16 %v870
    %v1006 = vunpack.c.l.b16 %v871
    %v1007 = vunpack.c.l.b16 %v872
    %v1008 = vunpack.c.l.b16 %v873
    %v1009 = vunpack.c.l.b16 %v874
    %v1010 = vunpack.c.l.b16 %v875
    %v1011 = vunpack.c.l.b16 %v876
    %v1012 = vunpack.c.l.b16 %v877
    %v1013 = vunpack.c.l.b16 %v878
    %v1014 = vunpack.c.l.b16 %v879
    %v1015 = vunpack.c.l.b16 %v880
    %v1016 = vunpack.c.l.b16 %v881
    %v1017 = vunpack.c.l.b16 %v882
    %v1018 = vunpack.c.l.b16 %v883
    %v1019 = vunpack.c.l.b16 %v884
    %v1020 = vunpack.c.l.b16 %v885
    %v1021 = vunpack.c.l.b16 %v886
    %v1022 = vunpack.c.l.b16 %v887
    %v1023 = vunpack.c.l.b16 %v888
    %v1024 = vunpack.c.l.b16 %v889
    %v1025 = vunpack.c.l.b16 %v890
    %v1026 = vunpack.c.l.b16 %v891
    %v1027 = vunpack.c.l.b16 %v892
    %v1028 = vunpack.c.l.b16 %v893
    %v1029 = vunpack.c.l.b16 %v894
    %v1030 = vunpack.c.l.b16 %v895
    %v1031 = vunpack.c.l.b16 %v896
    %v1032 = vunpack.c.l.b16 %v897
    %v1033 = vpack.c.b16 %v970, %v969
    %v1034 = vpack.c.b16 %v972, %v971
    %v1035 = vpack.c.b16 %v974, %v973
    %v1036 = vpack.c.b16 %v976, %v975
    %v1037 = vpack.c.b16 %v978, %v977
    %v1038 = vpack.c.b16 %v980, %v979
    %v1039 = vpack.c.b16 %v982, %v981
    %v1040 = vpack.c.b16 %v984, %v983
    %v1041 = vpack.c.b16 %v986, %v985
    %v1042 = vpack.c.b16 %v988, %v987
    %v1043 = vpack.c.b16 %v990, %v989
    %v1044 = vpack.c.b16 %v992, %v991
    %v1045 = vpack.c.b16 %v994, %v993
    %v1046 = vpack.c.b16 %v996, %v995
    %v1047 = vpack.c.b16 %v998, %v997
    %v1048 = vpack.c.b16 %v1000, %v999
    %v1049 = vpack.c.b16 %v1002, %v1001
    %v1050 = vpack.c.b16 %v1004, %v1003
    %v1051 = vpack.c.b16 %v1006, %v1005
    %v1052 = vpack.c.b16 %v1008, %v1007
    %v1053 = vpack.c.b16 %v1010, %v1009
    %v1054 = vpack.c.b16 %v1012, %v1011
    %v1055 = vpack.c.b16 %v1014, %v1013
    %v1056 = vpack.c.b16 %v1016, %v1015
    %v1057 = vpack.c.b16 %v1018, %v1017
    %v1058 = vpack.c.b16 %v1020, %v1019
    %v1059 = vpack.c.b16 %v1022, %v1021
    %v1060 = vpack.c.b16 %v1024, %v1023
    %v1061 = vpack.c.b16 %v1026, %v1025
    %v1062 = vpack.c.b16 %v1028, %v1027
    %v1063 = vpack.c.b16 %v1030, %v1029
    %v1064 = vpack.c.b16 %v1032, %v1031
    %1097 = vmatprep.subr.bf16.mxu0 0
    %1098 = vmatpush1.bf16.msra.mxu0 %v1033
    %1099 = vmatprep.subr.bf16.mxu0 0
    %1100 = vmatpush1.bf16.msra.mxu0 %v1034
    %1101 = vmatprep.subr.bf16.mxu0 0
    %1102 = vmatpush1.bf16.msra.mxu0 %v1035
    %1103 = vmatprep.subr.bf16.mxu0 0
    %1104 = vmatpush1.bf16.msra.mxu0 %v1036
    %1105 = vmatprep.subr.bf16.mxu0 0
    %1106 = vmatpush1.bf16.msra.mxu0 %v1037
    %1107 = vmatprep.subr.bf16.mxu0 0
    %1108 = vmatpush1.bf16.msra.mxu0 %v1038
    %1109 = vmatprep.subr.bf16.mxu0 0
    %1110 = vmatpush1.bf16.msra.mxu0 %v1039
    %1111 = vmatprep.subr.bf16.mxu0 0
    %1112 = vmatpush1.bf16.msra.mxu0 %v1040
    %1113 = vmatprep.subr.bf16.mxu0 0
    %1114 = vmatpush1.bf16.msra.mxu0 %v1041
    %1115 = vmatprep.subr.bf16.mxu0 0
    %1116 = vmatpush1.bf16.msra.mxu0 %v1042
    %1117 = vmatprep.subr.bf16.mxu0 0
    %1118 = vmatpush1.bf16.msra.mxu0 %v1043
    %1119 = vmatprep.subr.bf16.mxu0 0
    %1120 = vmatpush1.bf16.msra.mxu0 %v1044
    %1121 = vmatprep.subr.bf16.mxu0 0
    %1122 = vmatpush1.bf16.msra.mxu0 %v1045
    %1123 = vmatprep.subr.bf16.mxu0 0
    %1124 = vmatpush1.bf16.msra.mxu0 %v1046
    %1125 = vmatprep.subr.bf16.mxu0 0
    %1126 = vmatpush1.bf16.msra.mxu0 %v1047
    %1127 = vmatprep.subr.bf16.mxu0 0
    %1128 = vmatpush1.bf16.msra.mxu0 %v1048
    %1129 = vmatprep.mubr.bf16.mxu0 %v831
    %1130 = vmatmul.mubr.bf16.gmra.mrb[0].mxu0 %v830
    %v1131 = vpop.f32.mrb[0].mxu0
    %v1132 = vadd.f32 %v903, %v1131
    %v1133 = vpop.f32.mrb[0].mxu0
    %v1134 = vpop.f32.mrb[0].mxu0
    %v1135 = vpop.f32.mrb[0].mxu0
    %1136 = vdwg.mxu0
    %1137 = vmatprep.subr.bf16.mxu0 0
    %1138 = vmatpush1.bf16.msra.mxu0 %v1049
    %1139 = vmatprep.subr.bf16.mxu0 0
    %1140 = vmatpush1.bf16.msra.mxu0 %v1050
    %1141 = vmatprep.subr.bf16.mxu0 0
    %1142 = vmatpush1.bf16.msra.mxu0 %v1051
    %1143 = vmatprep.subr.bf16.mxu0 0
    %1144 = vmatpush1.bf16.msra.mxu0 %v1052
    %1145 = vmatprep.subr.bf16.mxu0 0
    %1146 = vmatpush1.bf16.msra.mxu0 %v1053
    %1147 = vmatprep.subr.bf16.mxu0 0
    %1148 = vmatpush1.bf16.msra.mxu0 %v1054
    %1149 = vmatprep.subr.bf16.mxu0 0
    %1150 = vmatpush1.bf16.msra.mxu0 %v1055
    %1151 = vmatprep.subr.bf16.mxu0 0
    %1152 = vmatpush1.bf16.msra.mxu0 %v1056
    %1153 = vmatprep.subr.bf16.mxu0 0
    %1154 = vmatpush1.bf16.msra.mxu0 %v1057
    %1155 = vmatprep.subr.bf16.mxu0 0
    %1156 = vmatpush1.bf16.msra.mxu0 %v1058
    %1157 = vmatprep.subr.bf16.mxu0 0
    %1158 = vmatpush1.bf16.msra.mxu0 %v1059
    %1159 = vmatprep.subr.bf16.mxu0 0
    %1160 = vmatpush1.bf16.msra.mxu0 %v1060
    %1161 = vmatprep.subr.bf16.mxu0 0
    %1162 = vmatpush1.bf16.msra.mxu0 %v1061
    %1163 = vmatprep.subr.bf16.mxu0 0
    %1164 = vmatpush1.bf16.msra.mxu0 %v1062
    %1165 = vmatprep.subr.bf16.mxu0 0
    %1166 = vmatpush1.bf16.msra.mxu0 %v1063
    %1167 = vmatprep.subr.bf16.mxu0 0
    %1168 = vmatpush1.bf16.msra.mxu0 %v1064
    %1169 = vmatprep.mubr.bf16.mxu0 %v833
    %1170 = vmatmul.mubr.bf16.gmra.mrb[0].mxu0 %v832
    %v1171 = vpop.f32.mrb[0].mxu0
    %v1172 = vadd.f32 %v1132, %v1171
    %v1173 = vpop.f32.mrb[0].mxu0
    %v1174 = vpop.f32.mrb[0].mxu0
    %v1175 = vpop.f32.mrb[0].mxu0
    %1176 = vdwg.mxu0
    %v1177 = vtanh.pop %v1172
    %1178 = vst [vmem:[#allocation11] sm:$0xff] %v1177
    // Predicated region
    $region58: #{tpu_custom_call.1} parent=1 // pred_check
      _
    $region59: #{tpu_custom_call.1} parent=1 // pred_check_branch
      %1180 = sbr.rel (0) target = $region61
    $region60: #{tpu_custom_call.1} parent=1 // pred_region
      %s1182 = ssub.s32 128, 128
      %1183 = vsyncadd [#allocation4], %s1182
      %s1185 = sshll.u32 [#allocation11], 4
      %s1186 = int_to_ptr.vmem [resolvable:$true] %s1185
      %1188 = dma.vmem_to_hbm [thread:$0]  %s1186, 128, %s9, [#allocation4]
    $region61: #{tpu_custom_call.1} parent=1 // pred_fallthru
      _
    // Predicated region
    $region62: #{tpu_custom_call.1} parent=1 // pred_check
      _
    $region63: #{tpu_custom_call.1} parent=1 // pred_check_branch
      %1190 = sbr.rel (0) target = $region65
    $region64: #{tpu_custom_call.1} parent=1 // pred_region
      %1191 = dma.done [#allocation4], 128
    $region65: #{tpu_custom_call.1} parent=1 // pred_fallthru
      _
    %1192 = vsyncpa [#allocation3], 1
    %1193 = vsyncpa [#allocation6], 1
    %1194 = vsyncpa [#allocation9], 1
    %1195 = vsyncpa [#allocation4], 1

</llo_original>
